<compile_context>
chip_gen: v6e
topology: v6e:2x2x1
jax: 0.10.0
libtpu: 0.0.40
codegen_flags: <defaults>
</compile_context>

<pallas_src>
import numpy as np
import jax
import jax.numpy as jnp
from jax.experimental import pallas as pl
from jax.experimental.pallas import tpu as pltpu

NUM_POOL_OPS = 3


def _mixed_pool_kernel(w_ref, p_ref, x_ref, out_x_ref, out_s2_ref):
    # w_ref   : SMEM (3,)   f32      architecture weights (w0 none, w1 topk, w2 sag)
    # p_ref   : VMEM (2, H) x.dtype  row 0 = p1 (topk score vec), row 1 = p2 (sag)
    # x_ref   : VMEM (TN,H) x.dtype  node-feature tile
    # out_x   : VMEM (TN,H) x.dtype  sum_k w_k * x_k
    # out_s2  : VMEM (TN,1) f32      sag score column (reused for top-k perm outside)
    x = x_ref[...]

    # Scores on the MXU (idle otherwise): (TN, H) @ (H, 2) -> (TN, 2), f32 acc.
    # Replaces two VPU-multiply + XLU lane-reduce trees per tile.
    s12 = jnp.dot(x, p_ref[...].T, preferred_element_type=jnp.float32)
    s1 = s12[:, 0:1]                                 # (TN, 1)
    s2 = s12[:, 1:2]                                 # (TN, 1)

    w0 = w_ref[0]
    w1 = w_ref[1]
    w2 = w_ref[2]

    # EUP work: 2 tanh per node.
    # sigmoid(s) = 0.5 * (tanh(0.5 * s) + 1)  -- single EUP push, no overflow.
    sig2 = 0.5 * (jnp.tanh(0.5 * s2) + 1.0)
    g = w0 + w1 * jnp.tanh(s1) + w2 * sig2           # (TN, 1) combined gate, f32

    out_x_ref[...] = (x.astype(jnp.float32) * g).astype(out_x_ref.dtype)
    out_s2_ref[...] = s2
    # TODO(synk): if xprof shows the (TN,1) score writeback pinching the vst
    # slot, emit it lane-dense as a (1,TN) row instead (minor; skipped).


def _round_up(a, b):
    return (a + b - 1) // b * b


def _vmem_limit_bytes():
    """Generation-specific scoped-VMEM limit.

    v7x has 64 MiB physical VMEM per TensorCore -> keep the scoped limit <=48MiB;
    v5e/v6e have 128 MiB -> allow up to 96 MiB for bigger blocks.
    """
    try:
        phys = int(pltpu.get_tpu_info().vmem_capacity_bytes)
    except Exception:
        phys = 64 << 20                              # conservative: v7x per-TC
    return max(32 << 20, min(phys - (16 << 20), 96 << 20))


def _pick_row_tile(n, h, vmem_limit):
    """Row tile as large as the VMEM budget allows (amortizes ~0.35us/step)."""
    budget = vmem_limit - (8 << 20)                  # headroom: temps / scratch
    tn = min(_round_up(n, 8), 8192)
    # Budget: 2x double-buffered x-in blocks + 2x out_x blocks + ~2 blocks of
    # elementwise / padded-MXU-result temporaries (counted at f32 width).
    while 6 * tn * h * 4 > budget and tn > 8:
        tn = _round_up(max(tn // 2, 8), 8)
    # v7x megacore: prefer an even number of balanced tiles so the "parallel"
    # grid axis shards evenly across both TensorCores.  Only applied when N is
    # big enough that the extra grid step is noise on 1-TC chips.
    tiles = pl.cdiv(n, tn)
    if tiles % 2 == 1 and n >= 2048:
        tiles += 1
        tn = _round_up(pl.cdiv(n, tiles), 8)
    return tn


def pooling_mixed_op(x, edge_index, edge_weights, data, batch, mask, weights,
                     p1, p2, ratio=0.5):
    """JAX/Pallas equivalent of PoolingMixedOp.forward.

    Returns (mixed_x, edge_index, mixed_edge_weight, batch, perm).
    """
    del data, mask  # carried through unused by the synthetic pooling ops
    N, H = x.shape
    itemsize = jnp.dtype(x.dtype).itemsize

    vmem_limit = _vmem_limit_bytes()
    tn = _pick_row_tile(N, H, vmem_limit)
    grid = (pl.cdiv(N, tn),)                         # partial last block masked

    # Pack score vectors once, streamed in x's dtype so the MXU dot runs native
    # (f32 demo -> f32; bf16 pipelines -> bf16 with f32 accumulate).
    p_packed = jnp.stack([p1, p2]).astype(x.dtype)   # (2, H)

    cost = pl.CostEstimate(
        flops=6 * N * H,
        transcendentals=2 * N,
        bytes_accessed=2 * N * H * itemsize + N * 4 + 2 * H * itemsize + 12,
    )

    out_x, score2 = pl.pallas_call(
        _mixed_pool_kernel,
        grid=grid,
        out_shape=(jax.ShapeDtypeStruct((N, H), x.dtype),
                   jax.ShapeDtypeStruct((N, 1), jnp.float32)),
        in_specs=[
            pl.BlockSpec(memory_space=pltpu.SMEM),          # arch weights
            pl.BlockSpec((2, H), lambda i: (0, 0)),         # packed score vecs
            pl.BlockSpec((tn, H), lambda i: (i, 0)),        # x tile
        ],
        out_specs=(
            pl.BlockSpec((tn, H), lambda i: (i, 0)),        # mixed x tile
            pl.BlockSpec((tn, 1), lambda i: (i, 0)),        # sag score column
        ),
        compiler_params=pltpu.CompilerParams(
            dimension_semantics=("parallel",),              # 2 TCs on v7x
            vmem_limit_bytes=vmem_limit,
        ),
        cost_estimate=cost,
    )(weights.astype(jnp.float32), p_packed, x)

    # Every pool op keeps edge weights unchanged -> sum_k w_k * ew_k = ew*sum(w).
    # Trivial fused scalar multiply; kept in plain XLA (no (1,E) kernel stores).
    mixed_ew = edge_weights * jnp.sum(weights)

    # ---- perm glue (not a hot path) --------------------------------------
    # Last op is the sag pool; its score comes straight from the kernel, so x
    # is not streamed from HBM a second time.  top_k avoids a full argsort.
    k = int(np.ceil(ratio * N))
    _, perm_last = jax.lax.top_k(score2[:, 0], k)
    perm_last = perm_last.astype(jnp.int32)
    # PyTorch's index_to_mask does `index.fill_(index[0])` IN PLACE, so the perm
    # that PoolingMixedOp returns has every entry overwritten by its first
    # element.  Reproduce that contract exactly.
    perm_returned = jnp.full((k,), perm_last[0], dtype=jnp.int32)
    # TODO(synk): new_perm (w_k * index_to_mask(perm_k) float64 masks) is
    # computed but discarded by the PyTorch forward; it is skipped here.

    return out_x, edge_index, mixed_ew, batch, perm_returned


if __name__ == "__main__":
    # Small deterministic problem: 16 nodes, hidden 128 (lane-dense), 256 edges.
    N, H, E = 16, 128, 256
    key = jax.random.PRNGKey(0)
    kx, ke, kw, kp1, kp2 = jax.random.split(key, 5)

    # Quantize x / p to bf16-representable f32 values so the check is exact
    # regardless of whether the MXU score dot runs 1-pass bf16 or full f32.
    x = jax.random.normal(kx, (N, H), dtype=jnp.float32)
    x = x.astype(jnp.bfloat16).astype(jnp.float32)
    edge_index = jax.random.randint(ke, (2, E), 0, N, dtype=jnp.int32)
    edge_weights = jax.random.uniform(kw, (E,), dtype=jnp.float32)
    batch = jnp.zeros((N,), dtype=jnp.int32)
    data = None
    node_mask = jnp.ones((N,), dtype=jnp.float32)

    # Deterministic "architecture" weights (softmaxed) and op parameters.
    weights = jax.nn.softmax(jnp.array([0.1, 0.2, 0.3], dtype=jnp.float32))
    p1 = (jax.random.normal(kp1, (H,), dtype=jnp.float32) * 0.1
          ).astype(jnp.bfloat16).astype(jnp.float32)
    p2 = (jax.random.normal(kp2, (H,), dtype=jnp.float32) * 0.1
          ).astype(jnp.bfloat16).astype(jnp.float32)

    out = pooling_mixed_op(x, edge_index, edge_weights, data, batch, node_mask,
                           weights, p1, p2, ratio=0.5)
    out = jax.block_until_ready(out)

    mixed_x, ei, mixed_ew, b, perm = out
    assert mixed_x.shape == (N, H)
    assert mixed_ew.shape == (E,)
    assert ei.shape == (2, E)
    assert perm.shape[0] == N // 2

    # Cross-check against a plain-JAX reference of the same synthetic ops.
    s1 = x @ p1
    s2 = x @ p2
    sig = 1.0 / (1.0 + jnp.exp(-s2))
    ref_x = (weights[0] * x
             + weights[1] * x * jnp.tanh(s1)[:, None]
             + weights[2] * x * sig[:, None])
    ref_ew = edge_weights * jnp.sum(weights)
    np.testing.assert_allclose(np.asarray(mixed_x), np.asarray(ref_x),
                               rtol=1e-4, atol=1e-4)
    np.testing.assert_allclose(np.asarray(mixed_ew), np.asarray(ref_ew),
                               rtol=1e-5, atol=1e-5)

    print("KERNEL_OK")
</pallas_src>

<mosaic_0001>
module attributes {stable_mosaic.version = 11 : i64} {
  func.func @_mixed_pool_kernel(%arg0: i32, %arg1: memref<3xf32, #tpu.memory_space<smem>>, %arg2: memref<2x128xf32, #tpu.memory_space<vmem>>, %arg3: memref<16x128xf32, #tpu.memory_space<vmem>>, %arg4: memref<16x128xf32, #tpu.memory_space<vmem>>, %arg5: memref<16x1xf32, #tpu.memory_space<vmem>>) attributes {dimension_semantics = [#tpu.dimension_semantics<parallel>], iteration_bounds = array<i64: 1>, scalar_prefetch = 0 : i64, scratch_operands = 0 : i64, tpu.core_type = #tpu.core_type<tc>, window_params = [{transform_indices = @transform_0, window_bounds = array<i64: 3>}, {pipeline_mode = #tpu.pipeline_mode<synchronous>, transform_indices = @transform_1, window_bounds = array<i64: 2, 128>}, {transform_indices = @transform_2, window_bounds = array<i64: 16, 128>}, {transform_indices = @transform_3, window_bounds = array<i64: 16, 128>}, {transform_indices = @transform_4, window_bounds = array<i64: 16, 1>}]} {
    %c0 = arith.constant 0 : index
    %c0_0 = arith.constant 0 : index
    %0 = vector.load %arg3[%c0, %c0_0] : memref<16x128xf32, #tpu.memory_space<vmem>>, vector<16x128xf32>
    %c0_1 = arith.constant 0 : index
    %c0_2 = arith.constant 0 : index
    %1 = vector.load %arg2[%c0_1, %c0_2] : memref<2x128xf32, #tpu.memory_space<vmem>>, vector<2x128xf32>
    %2 = tpu.transpose %1, [1, 0] : vector<2x128xf32> -> vector<128x2xf32>
    %cst = arith.constant dense<0.000000e+00> : vector<16x2xf32>
    %3 = tpu.matmul %0, %2, %cst {dimension_numbers = #tpu.dot_dimension_numbers<[1], [0], [0], [1], [0, 0, 1, 1], [], []>} : vector<16x128xf32>, vector<128x2xf32>, vector<16x2xf32> -> vector<16x2xf32>
    %4 = vector.extract_strided_slice %3 {offsets = [0, 0], sizes = [16, 1], strides = [1, 1]} : vector<16x2xf32> to vector<16x1xf32>
    %5 = vector.extract_strided_slice %3 {offsets = [0, 1], sizes = [16, 1], strides = [1, 1]} : vector<16x2xf32> to vector<16x1xf32>
    %c0_3 = arith.constant 0 : index
    %6 = memref.load %arg1[%c0_3] : memref<3xf32, #tpu.memory_space<smem>>
    %c1 = arith.constant 1 : index
    %7 = memref.load %arg1[%c1] : memref<3xf32, #tpu.memory_space<smem>>
    %c2 = arith.constant 2 : index
    %8 = memref.load %arg1[%c2] : memref<3xf32, #tpu.memory_space<smem>>
    %cst_4 = arith.constant 5.000000e-01 : f32
    %9 = vector.broadcast %cst_4 : f32 to vector<16x1xf32>
    %10 = arith.mulf %9, %5 : vector<16x1xf32>
    %11 = math.tanh %10 : vector<16x1xf32>
    %cst_5 = arith.constant 1.000000e+00 : f32
    %12 = vector.broadcast %cst_5 : f32 to vector<16x1xf32>
    %13 = arith.addf %11, %12 : vector<16x1xf32>
    %cst_6 = arith.constant 5.000000e-01 : f32
    %14 = vector.broadcast %cst_6 : f32 to vector<16x1xf32>
    %15 = arith.mulf %14, %13 : vector<16x1xf32>
    %16 = math.tanh %4 : vector<16x1xf32>
    %17 = vector.broadcast %7 : f32 to vector<16x1xf32>
    %18 = arith.mulf %17, %16 : vector<16x1xf32>
    %19 = vector.broadcast %6 : f32 to vector<16x1xf32>
    %20 = arith.addf %19, %18 : vector<16x1xf32>
    %21 = vector.broadcast %8 : f32 to vector<16x1xf32>
    %22 = arith.mulf %21, %15 : vector<16x1xf32>
    %23 = arith.addf %20, %22 : vector<16x1xf32>
    %24 = vector.broadcast %23 : vector<16x1xf32> to vector<16x128xf32>
    %25 = arith.mulf %0, %24 : vector<16x128xf32>
    %c0_7 = arith.constant 0 : index
    %c0_8 = arith.constant 0 : index
    %26 = vector.load %arg4[%c0_7, %c0_8] : memref<16x128xf32, #tpu.memory_space<vmem>>, vector<16x128xf32>
    tpu.vector_store %arg4[%c0_7, %c0_8], %25 {strides = array<i32>} : memref<16x128xf32, #tpu.memory_space<vmem>>, vector<16x128xf32>,
    %c0_9 = arith.constant 0 : index
    %c0_10 = arith.constant 0 : index
    %27 = vector.load %arg5[%c0_9, %c0_10] : memref<16x1xf32, #tpu.memory_space<vmem>>, vector<16x1xf32>
    tpu.vector_store %arg5[%c0_9, %c0_10], %5 {strides = array<i32>} : memref<16x1xf32, #tpu.memory_space<vmem>>, vector<16x1xf32>,
    return
  }
  func.func @transform_0(%arg0: i32) -> i32 {
    %c0_i32 = arith.constant 0 : i32
    %c0_i32_0 = arith.constant 0 : i32
    return %c0_i32 : i32
  }
  func.func @transform_1(%arg0: i32) -> (i32, i32) {
    %c0_i32 = arith.constant 0 : i32
    %c0_i32_0 = arith.constant 0 : i32
    %c0_i32_1 = arith.constant 0 : i32
    return %c0_i32, %c0_i32_0 : i32, i32
  }
  func.func @transform_2(%arg0: i32) -> (i32, i32) {
    %c0_i32 = arith.constant 0 : i32
    %c0_i32_0 = arith.constant 0 : i32
    return %arg0, %c0_i32 : i32, i32
  }
  func.func @transform_3(%arg0: i32) -> (i32, i32) {
    %c0_i32 = arith.constant 0 : i32
    %c0_i32_0 = arith.constant 0 : i32
    return %arg0, %c0_i32 : i32, i32
  }
  func.func @transform_4(%arg0: i32) -> (i32, i32) {
    %c0_i32 = arith.constant 0 : i32
    %c0_i32_0 = arith.constant 0 : i32
    return %arg0, %c0_i32 : i32, i32
  }
}

</mosaic_0001>

<llo_original>
// kernel: tpu_custom_call.1
$region0: #{tpu_custom_call.1}
  #allocation0 [shape = 'u32[]', space=smem, size = 0x4, offset = 0x4, fixed_abs, tag = 'smem constant byte address 0x4 - core index']
  #allocation1 [shape = 'u32[144,128]{1,0:T(1,128)}', space=vmem, size = 0x12000, scoped, tag = 'internal scratch']
  %s0 = inlined_call_operand.hbm [shape: f32[3], index: 0, kind: input, shape index: {}]
  %s1 = inlined_call_operand.hbm [shape: f32[2,128], index: 1, kind: input, shape index: {}]
  %s2 = inlined_call_operand.hbm [shape: f32[16,128], index: 2, kind: input, shape index: {}]
  %s3 = inlined_call_operand.hbm [shape: f32[16,128], index: 3, kind: output, shape index: {0}]
  %s4 = inlined_call_operand.vmem [shape: f32[16,1], index: 4, kind: output, shape index: {1}]
  %5 = xla_tuple %s3, %s4
  %s6 = sld [smem:[#allocation0]]
  $region42: #{tpu_custom_call.1} parent=0
    _
  %s8 = ssub.s32 1, %s6
  %s9 = scalar_select 0, %s8, %s6
  $region1: #{tpu_custom_call.1} parent=0
    #allocation2 [shape = 'u8[512]{0}', space=smem, size = 0x200, scoped, tag = 'input window, operand 0, single buffered']
    #allocation3 [shape = 's32[1]{0}', space=sflag, size = 0x4, scoped, tag = 'scoped memory for tpu_custom_call.1']
    #allocation4 [shape = 's32[1]{0}', space=sflag, size = 0x4, scoped, tag = 'scoped memory for tpu_custom_call.1']
    #allocation5 [shape = 's32[1]{0}', space=sflag, size = 0x4, scoped, tag = 'scoped memory for tpu_custom_call.1']
    #allocation6 [shape = 'u8[1024]{0}', space=vmem, size = 0x400, scoped, tag = 'input window, operand 1, single buffered']
    #allocation7 [shape = 'u8[8192]{0}', space=vmem, size = 0x2000, scoped, tag = 'input window, operand 2, single buffered']
    #allocation8 [shape = 's32[1]{0}', space=sflag, size = 0x4, scoped, tag = 'scoped memory for tpu_custom_call.1']
    #allocation9 [shape = 'u8[8192]{0}', space=vmem, size = 0x2000, scoped, tag = 'output window, operand 0, single buffered']
    %10 = vsyncpa [#allocation5], 0
    %11 = vsyncpa [#allocation3], 0
    %12 = vsyncpa [#allocation8], 0
    %13 = vsyncpa [#allocation4], 0
    // Predicated region
    $region2: #{tpu_custom_call.1} parent=1 // pred_check
      _
    $region3: #{tpu_custom_call.1} parent=1 // pred_check_branch
      %15 = sbr.rel (0) target = $region5
    $region4: #{tpu_custom_call.1} parent=1 // pred_region
      %s17 = ssub.s32 16, 16
      %18 = vsyncadd [#allocation5], %s17
      %21 = dma.hbm_to_smem %s0, 16, [#allocation2], [#allocation5]
    $region5: #{tpu_custom_call.1} parent=1 // pred_fallthru
      _
    // Predicated region
    $region6: #{tpu_custom_call.1} parent=1 // pred_check
      _
    $region7: #{tpu_custom_call.1} parent=1 // pred_check_branch
      %23 = sbr.rel (0) target = $region9
    $region8: #{tpu_custom_call.1} parent=1 // pred_region
      %s25 = ssub.s32 32, 32
      %26 = vsyncadd [#allocation3], %s25
      %s28 = sshll.u32 [#allocation6], 4
      %s29 = int_to_ptr.vmem [resolvable:$true] %s28
      %31 = dma.hbm_to_vmem [thread:$0]  %s1, 32, %s29, [#allocation3]
    $region9: #{tpu_custom_call.1} parent=1 // pred_fallthru
      _
    // Predicated region
    $region10: #{tpu_custom_call.1} parent=1 // pred_check
      _
    $region11: #{tpu_custom_call.1} parent=1 // pred_check_branch
      %33 = sbr.rel (0) target = $region13
    $region12: #{tpu_custom_call.1} parent=1 // pred_region
      %s35 = ssub.s32 256, 256
      %36 = vsyncadd [#allocation8], %s35
      %s37 = sshll.u32 [#allocation7], 4
      %s38 = int_to_ptr.vmem [resolvable:$true] %s37
      %43 = dma.hbm_to_vmem [thread:$0]  %s2, 256, %s38, [#allocation8], 128, 128, 8
    $region13: #{tpu_custom_call.1} parent=1 // pred_fallthru
      _
    // Predicated region
    $region14: #{tpu_custom_call.1} parent=1 // pred_check
      _
    $region15: #{tpu_custom_call.1} parent=1 // pred_check_branch
      %45 = sbr.rel (0) target = $region17
    $region16: #{tpu_custom_call.1} parent=1 // pred_region
      %46 = dma.done [#allocation5], 16
    $region17: #{tpu_custom_call.1} parent=1 // pred_fallthru
      _
    // Predicated region
    $region18: #{tpu_custom_call.1} parent=1 // pred_check
      _
    $region19: #{tpu_custom_call.1} parent=1 // pred_check_branch
      %48 = sbr.rel (0) target = $region21
    $region20: #{tpu_custom_call.1} parent=1 // pred_region
      %49 = dma.done [#allocation3], 32
    $region21: #{tpu_custom_call.1} parent=1 // pred_fallthru
      _
    // Predicated region
    $region22: #{tpu_custom_call.1} parent=1 // pred_check
      _
    $region23: #{tpu_custom_call.1} parent=1 // pred_check_branch
      %51 = sbr.rel (0) target = $region25
    $region24: #{tpu_custom_call.1} parent=1 // pred_region
      %52 = dma.done [#allocation8], 256
    $region25: #{tpu_custom_call.1} parent=1 // pred_fallthru
      _
    %53 = sfence
    %v54 = vld [vmem:[#allocation7] sm:$0xff]
    %v55 = vld [vmem:[#allocation7 + $0x8] sm:$0xff]
    %v56 = vld [vmem:[#allocation6] sm:$0x3]
    %57 = vmatprep.subr.mxu0 0.0
    %58 = vmatpush1.xpose.msra.mxu0 0.0
    %59 = vmatprep.subr.mxu0 0.0
    %60 = vmatpush1.xpose.msra.mxu0 0.0
    %61 = vmatprep.subr.mxu0 0.0
    %62 = vmatpush1.xpose.msra.mxu0 0.0
    %63 = vmatprep.subr.mxu0 0.0
    %64 = vmatpush1.xpose.msra.mxu0 0.0
    %65 = vmatprep.subr.mxu0 0.0
    %66 = vmatpush1.xpose.msra.mxu0 0.0
    %67 = vmatprep.subr.mxu0 0.0
    %68 = vmatpush1.xpose.msra.mxu0 0.0
    %69 = vmatprep.subr.mxu0 0.0
    %70 = vmatpush1.xpose.msra.mxu0 0.0
    %71 = vmatprep.subr.mxu0 0.0
    %72 = vmatpush1.xpose.msra.mxu0 0.0
    %73 = vmatprep.subr.mxu0 0.0
    %74 = vmatpush1.xpose.msra.mxu0 0.0
    %75 = vmatprep.subr.mxu0 0.0
    %76 = vmatpush1.xpose.msra.mxu0 0.0
    %77 = vmatprep.subr.mxu0 0.0
    %78 = vmatpush1.xpose.msra.mxu0 0.0
    %79 = vmatprep.subr.mxu0 0.0
    %80 = vmatpush1.xpose.msra.mxu0 0.0
    %81 = vmatprep.subr.mxu0 0.0
    %82 = vmatpush1.xpose.msra.mxu0 0.0
    %83 = vmatprep.subr.mxu0 0.0
    %84 = vmatpush1.xpose.msra.mxu0 0.0
    %85 = vmatprep.subr.mxu0 0.0
    %86 = vmatpush1.xpose.msra.mxu0 0.0
    %87 = vmatprep.subr.mxu0 0.0
    %88 = vmatpush1.xpose.msra.mxu0 %v56
    %89 = vmatprep.subr.mxu0 0.0
    %90 = vmatpush2.xpose.msra.mxu0 0.0
    %91 = vmatprep.subr.mxu0 0.0
    %92 = vmatpush2.xpose.msra.mxu0 0.0
    %93 = vmatprep.subr.mxu0 0.0
    %94 = vmatpush2.xpose.msra.mxu0 0.0
    %95 = vmatprep.subr.mxu0 0.0
    %96 = vmatpush2.xpose.msra.mxu0 0.0
    %97 = vmatprep.subr.mxu0 0.0
    %98 = vmatpush2.xpose.msra.mxu0 0.0
    %99 = vmatprep.subr.mxu0 0.0
    %100 = vmatpush2.xpose.msra.mxu0 0.0
    %101 = vmatprep.subr.mxu0 0.0
    %102 = vmatpush2.xpose.msra.mxu0 0.0
    %103 = vmatprep.subr.mxu0 0.0
    %104 = vmatpush2.xpose.msra.mxu0 0.0
    %105 = vmatprep.subr.mxu0 0.0
    %106 = vmatpush2.xpose.msra.mxu0 0.0
    %107 = vmatprep.subr.mxu0 0.0
    %108 = vmatpush2.xpose.msra.mxu0 0.0
    %109 = vmatprep.subr.mxu0 0.0
    %110 = vmatpush2.xpose.msra.mxu0 0.0
    %111 = vmatprep.subr.mxu0 0.0
    %112 = vmatpush2.xpose.msra.mxu0 0.0
    %113 = vmatprep.subr.mxu0 0.0
    %114 = vmatpush2.xpose.msra.mxu0 0.0
    %115 = vmatprep.subr.mxu0 0.0
    %116 = vmatpush2.xpose.msra.mxu0 0.0
    %117 = vmatprep.subr.mxu0 0.0
    %118 = vmatpush2.xpose.msra.mxu0 0.0
    %119 = vmatprep.subr.mxu0 0.0
    %120 = vmatpush2.xpose.msra.mxu0 0.0
    %121 = vmatprep.mubr.f32.mxu0 0.0
    %122 = vmatmul.mubr.f32.gmra.mxu0 %v54
    %v123 = vpop.f32.mrf.mxu0
    %v124 = vadd.f32 0.0, %v123
    %v125 = vpop.f32.mrf.mxu0
    %126 = vmatprep.mubr.f32.mxu0 0.0
    %127 = vmatmul.mubr.f32.gmra.mxu0 %v55
    %v128 = vpop.f32.mrf.mxu0
    %v129 = vadd.f32 0.0, %v128
    %v130 = vpop.f32.mrf.mxu0
    %131 = vdwg.mxu0
    %s132 = sld [smem:[#allocation2]]
    %s133 = sld [smem:[#allocation2 + $0x1]]
    %s134 = sld [smem:[#allocation2 + $0x2]]
    %v135 = vmul.f32 %v124, 0.5
    %v136 = vmul.f32 %v129, 0.5
    %v137 = vtanh.pop %v135
    %v138 = vtanh.pop %v136
    %v139 = vadd.f32 %v137, 1.0
    %v140 = vadd.f32 %v138, 1.0
    %v141 = vmul.f32 %v139, 0.5
    %v142 = vmul.f32 %v140, 0.5
    %v143 = vtanh.pop %v124
    %v144 = vtanh.pop %v129
    %v145 = vstv %s133
    %v146 = vmul.f32 %v145, %v143
    %v147 = vmul.f32 %v145, %v144
    %v148 = vstv %s132
    %v149 = vadd.f32 %v148, %v146
    %v150 = vadd.f32 %v148, %v147
    %v151 = vstv %s134
    %v152 = vmul.f32 %v151, %v141
    %v153 = vmul.f32 %v151, %v142
    %156 = vrot.lane.b32.xlu0 %v152, 127
    %v157 = vpop.permute.xlu0 %156
    %158 = vrot.lane.b32.xlu0 %v153, 127
    %v159 = vpop.permute.xlu0 %158
    %v162 = vadd.f32 %v149, %v157
    %v163 = vadd.f32 %v150, %v159
    %165 = vset.pattern.permute.xlu0 0
    %166 = vperm.xlu0 %165, %v162
    %v167 = vpop.permute.xlu0 %166
    %170 = vset.pattern.permute.xlu0 0
    %171 = vperm.xlu0 %170, %v163
    %v172 = vpop.permute.xlu0 %171
    %v174 = vmul.f32 %v54, %v167
    %v175 = vmul.f32 %v55, %v172
    %176 = vst [vmem:[#allocation9] sm:$0xff] %v174
    %177 = vst [vmem:[#allocation9 + $0x8] sm:$0xff] %v175
    %180 = vrot.lane.b32.xlu0 %v124, 127
    %v181 = vpop.permute.xlu0 %180
    %182 = vrot.lane.b32.xlu0 %v129, 127
    %v183 = vpop.permute.xlu0 %182
    %vm186 = vcmask 7168
    %187 = vst.msk [vmem:[%s4] sm:$0xff] %vm186, %v181
    %188 = vst.msk [vmem:[%s4 + $0x8] sm:$0xff] %vm186, %v183
    // Predicated region
    $region26: #{tpu_custom_call.1} parent=1 // pred_check
      _
    $region27: #{tpu_custom_call.1} parent=1 // pred_check_branch
      %190 = sbr.rel (0) target = $region29
    $region28: #{tpu_custom_call.1} parent=1 // pred_region
      %s192 = ssub.s32 256, 256
      %193 = vsyncadd [#allocation4], %s192
      %s194 = sshll.u32 [#allocation9], 4
      %s195 = int_to_ptr.vmem [resolvable:$true] %s194
      %200 = dma.vmem_to_hbm [thread:$0]  %s195, 256, %s3, [#allocation4], 128, 128, 8
    $region29: #{tpu_custom_call.1} parent=1 // pred_fallthru
      _
    // Predicated region
    $region30: #{tpu_custom_call.1} parent=1 // pred_check
      _
    $region31: #{tpu_custom_call.1} parent=1 // pred_check_branch
      %202 = sbr.rel (0) target = $region33
    $region32: #{tpu_custom_call.1} parent=1 // pred_region
      _
    $region33: #{tpu_custom_call.1} parent=1 // pred_fallthru
      _
    // Predicated region
    $region34: #{tpu_custom_call.1} parent=1 // pred_check
      _
    $region35: #{tpu_custom_call.1} parent=1 // pred_check_branch
      %204 = sbr.rel (0) target = $region37
    $region36: #{tpu_custom_call.1} parent=1 // pred_region
      %205 = dma.done [#allocation4], 256
    $region37: #{tpu_custom_call.1} parent=1 // pred_fallthru
      _
    // Predicated region
    $region38: #{tpu_custom_call.1} parent=1 // pred_check
      _
    $region39: #{tpu_custom_call.1} parent=1 // pred_check_branch
      %207 = sbr.rel (0) target = $region41
    $region40: #{tpu_custom_call.1} parent=1 // pred_region
      _
    $region41: #{tpu_custom_call.1} parent=1 // pred_fallthru
      _
    %208 = vsyncpa [#allocation3], 1
    %209 = vsyncpa [#allocation8], 1
    %210 = vsyncpa [#allocation4], 1
    %211 = vsyncpa [#allocation5], 1

</llo_original>
